<compile_context>
chip_gen: v7x
topology: tpu7x:2x2x1
jax: 0.10.0
libtpu: 0.0.40
codegen_flags: <defaults>
</compile_context>

<pallas_src>
import jax
import jax.numpy as jnp
from jax import lax
from jax.experimental import pallas as pl
from jax.experimental.pallas import tpu as pltpu


def _pono_kernel(x_ref, y_ref, mean_ref, std_ref, *, eps, inv_cm1):
    # Block layout: channels on axis -2 (sublanes), spatial tile on lanes.
    xf = x_ref[...].astype(jnp.float32)
    mean = jnp.mean(xf, axis=-2, keepdims=True)
    diff = xf - mean
    # Unbiased variance (/(C-1)) to match torch.Tensor.var default.
    # For C == 1 inv_cm1 is NaN, matching torch's NaN for a single sample.
    var_eps = (
        jnp.sum(diff * diff, axis=-2, keepdims=True) * jnp.float32(inv_cm1)
        + jnp.float32(eps)
    )
    rstd = lax.rsqrt(var_eps)  # EUP slot; big divide -> VPU multiply
    # Recompute (x - mean) at the store so the full-block f32 diff does not
    # have to stay live (keeps VMEM headroom for larger tiles).
    y_ref[...] = ((x_ref[...].astype(jnp.float32) - mean) * rstd).astype(y_ref.dtype)
    mean_ref[...] = mean.astype(mean_ref.dtype)
    std_ref[...] = jnp.sqrt(var_eps).astype(std_ref.dtype)  # small (…,1,T) row


def _ceil_to(v, m):
    return -(-v // m) * m


def pono(x, eps=1e-5, *, vmem_budget_bytes=24 << 20):
    """x: (N, C, H, W) float array. Returns (y, mean, std) matching PyTorch PONO."""
    n, c, h, w = x.shape
    hw = h * w
    x3 = x.reshape(n, c, hw)  # contiguous merge — free

    itemsize = jnp.dtype(x.dtype).itemsize
    # Per-element VMEM cost of one x-block: double-buffered x + y DMA buffers
    # (2*itemsize each) plus ~2x f32 temporaries (upcast / diff) = 4*s + 8 B.
    elem_budget = max(1024, vmem_budget_bytes // (4 * itemsize + 8))
    c_pad = _ceil_to(c, 8)      # sublane padding of the (8,128) tile layout
    hw_pad = _ceil_to(hw, 128)  # lane padding

    # torch var(unbiased=True) of a single sample is NaN; mirror that for C==1.
    inv_cm1 = 1.0 / (c - 1) if c > 1 else float("nan")

    kernel = lambda xr, yr, mr, sr: _pono_kernel(
        xr, yr, mr, sr, eps=eps, inv_cm1=inv_cm1
    )

    if c_pad * hw_pad <= elem_budget:
        # Batch-tiled path: a whole (C, HW) slab fits in one block, so tile over
        # N. Each step moves one contiguous n_t*C*HW slab (big DMAs even when
        # HW is small or not a multiple of 128).
        n_t = max(1, min(n, elem_budget // (c_pad * hw_pad)))
        if n >= 2:
            n_t = min(n_t, _ceil_to(n, 2) // 2)  # keep >=2 parallel grid steps
        grid = (pl.cdiv(n, n_t),)
        in_specs = [pl.BlockSpec((n_t, c, hw), lambda i: (i, 0, 0))]
        out_specs = [
            pl.BlockSpec((n_t, c, hw), lambda i: (i, 0, 0)),
            pl.BlockSpec((n_t, 1, hw), lambda i: (i, 0, 0)),
            pl.BlockSpec((n_t, 1, hw), lambda i: (i, 0, 0)),
        ]
        dims = ("parallel",)
    else:
        # Spatial-tiled path: 128-multiple lane tile sized purely by the byte
        # budget; cdiv grid masks the partial last block.
        lane_budget = max(128, ((elem_budget // c_pad) // 128) * 128)
        if hw % 128 == 0 and hw <= lane_budget:
            t_hw = hw
        else:
            t_hw = max(128, min(lane_budget, (hw // 128) * 128))
        grid = (n, pl.cdiv(hw, t_hw))
        in_specs = [pl.BlockSpec((pl.Squeezed(), c, t_hw), lambda i, j: (i, 0, j))]
        out_specs = [
            pl.BlockSpec((pl.Squeezed(), c, t_hw), lambda i, j: (i, 0, j)),
            pl.BlockSpec((pl.Squeezed(), 1, t_hw), lambda i, j: (i, 0, j)),
            pl.BlockSpec((pl.Squeezed(), 1, t_hw), lambda i, j: (i, 0, j)),
        ]
        dims = ("parallel", "parallel")

    cost = pl.CostEstimate(
        flops=5 * n * c * hw,                                # sub, sq, sums, scale
        transcendentals=2 * n * hw,                          # rsqrt + sqrt rows
        bytes_accessed=(2 * n * c * hw + 2 * n * hw) * itemsize,
    )

    y3, mean3, std3 = pl.pallas_call(
        kernel,
        out_shape=(
            jax.ShapeDtypeStruct((n, c, hw), x.dtype),
            jax.ShapeDtypeStruct((n, 1, hw), x.dtype),
            jax.ShapeDtypeStruct((n, 1, hw), x.dtype),
        ),
        grid_spec=pltpu.PrefetchScalarGridSpec(
            num_scalar_prefetch=0,
            grid=grid,
            in_specs=in_specs,
            out_specs=out_specs,
        ),
        compiler_params=pltpu.CompilerParams(
            dimension_semantics=dims,
            # Explicit scoped-VMEM limit: above v5e's 16 MiB default, well under
            # v7x's 64 MiB physical; block budget above keeps usage ~24 MiB.
            vmem_limit_bytes=40 << 20,
        ),
        cost_estimate=cost,
    )(x3)

    return (
        y3.reshape(n, c, h, w),
        mean3.reshape(n, 1, h, w),
        std3.reshape(n, 1, h, w),
    )


def _pono_ref(x, eps=1e-5):
    # pure-JAX reference (matches PyTorch semantics)
    mean = jnp.mean(x, axis=1, keepdims=True)
    var = jnp.sum((x - mean) ** 2, axis=1, keepdims=True) / (x.shape[1] - 1)
    std = jnp.sqrt(var + eps)
    return (x - mean) / std, mean, std


if __name__ == "__main__":
    key = jax.random.PRNGKey(0)
    k1, k2 = jax.random.split(key)

    # Primary check: the module's expected NCHW use, (2, 4, 16, 16).
    x = jax.random.normal(k1, (2, 4, 16, 16), dtype=jnp.float32)
    y, mean, std = pono(x)
    jax.block_until_ready((y, mean, std))

    y_ref, mean_ref, std_ref = _pono_ref(x)
    assert y.shape == (2, 4, 16, 16)
    assert mean.shape == (2, 1, 16, 16)
    assert std.shape == (2, 1, 16, 16)
    assert jnp.allclose(y, y_ref, atol=1e-5, rtol=1e-5)
    assert jnp.allclose(mean, mean_ref, atol=1e-6, rtol=1e-6)
    assert jnp.allclose(std, std_ref, atol=1e-5, rtol=1e-5)

    # Boundary check: HW not a multiple of 128 with a deliberately tiny budget,
    # forcing the spatial-tiled cdiv path with a masked partial last block.
    x2 = jax.random.normal(k2, (2, 4, 24, 24), dtype=jnp.float32)
    y2, m2, s2 = pono(x2, vmem_budget_bytes=1 << 16)
    jax.block_until_ready((y2, m2, s2))
    y2r, m2r, s2r = _pono_ref(x2)
    assert jnp.allclose(y2, y2r, atol=1e-5, rtol=1e-5)
    assert jnp.allclose(m2, m2r, atol=1e-6, rtol=1e-6)
    assert jnp.allclose(s2, s2r, atol=1e-5, rtol=1e-5)

    print("KERNEL_OK")
</pallas_src>

<mosaic_0001>
module attributes {stable_mosaic.version = 11 : i64} {
  func.func @_lambda_(%arg0: i32, %arg1: memref<1x4x256xf32, #tpu.memory_space<vmem>>, %arg2: memref<1x4x256xf32, #tpu.memory_space<vmem>>, %arg3: memref<1x1x256xf32, #tpu.memory_space<vmem>>, %arg4: memref<1x1x256xf32, #tpu.memory_space<vmem>>) attributes {dimension_semantics = [#tpu.dimension_semantics<parallel>], iteration_bounds = array<i64: 2>, scalar_prefetch = 0 : i64, scratch_operands = 0 : i64, tpu.core_type = #tpu.core_type<tc>, window_params = [{transform_indices = @transform_0, window_bounds = array<i64: 1, 4, 256>}, {transform_indices = @transform_1, window_bounds = array<i64: 1, 4, 256>}, {transform_indices = @transform_2, window_bounds = array<i64: 1, 1, 256>}, {transform_indices = @transform_3, window_bounds = array<i64: 1, 1, 256>}]} {
    %c0 = arith.constant 0 : index
    %c0_0 = arith.constant 0 : index
    %c0_1 = arith.constant 0 : index
    %0 = vector.load %arg1[%c0, %c0_0, %c0_1] : memref<1x4x256xf32, #tpu.memory_space<vmem>>, vector<1x4x256xf32>
    %cst = arith.constant dense<0.000000e+00> : vector<1x256xf32>
    %1 = vector.multi_reduction <add>, %0, %cst [1] : vector<1x4x256xf32> to vector<1x256xf32>
    %2 = vector.shape_cast %1 : vector<1x256xf32> to vector<1x1x256xf32>
    %cst_2 = arith.constant 4.000000e+00 : f32
    %3 = vector.broadcast %cst_2 : f32 to vector<1x1x256xf32>
    %4 = arith.divf %2, %3 : vector<1x1x256xf32>
    %5 = vector.broadcast %4 : vector<1x1x256xf32> to vector<1x4x256xf32>
    %6 = arith.subf %0, %5 : vector<1x4x256xf32>
    %7 = arith.mulf %6, %6 : vector<1x4x256xf32>
    %cst_3 = arith.constant dense<0.000000e+00> : vector<1x256xf32>
    %8 = vector.multi_reduction <add>, %7, %cst_3 [1] : vector<1x4x256xf32> to vector<1x256xf32>
    %9 = vector.shape_cast %8 : vector<1x256xf32> to vector<1x1x256xf32>
    %cst_4 = arith.constant 0.333333343 : f32
    %10 = vector.broadcast %cst_4 : f32 to vector<1x1x256xf32>
    %11 = arith.mulf %9, %10 : vector<1x1x256xf32>
    %cst_5 = arith.constant 9.99999974E-6 : f32
    %12 = vector.broadcast %cst_5 : f32 to vector<1x1x256xf32>
    %13 = arith.addf %11, %12 : vector<1x1x256xf32>
    %14 = math.rsqrt %13 : vector<1x1x256xf32>
    %c0_6 = arith.constant 0 : index
    %c0_7 = arith.constant 0 : index
    %c0_8 = arith.constant 0 : index
    %15 = vector.load %arg1[%c0_6, %c0_7, %c0_8] : memref<1x4x256xf32, #tpu.memory_space<vmem>>, vector<1x4x256xf32>
    %16 = vector.broadcast %4 : vector<1x1x256xf32> to vector<1x4x256xf32>
    %17 = arith.subf %15, %16 : vector<1x4x256xf32>
    %18 = vector.broadcast %14 : vector<1x1x256xf32> to vector<1x4x256xf32>
    %19 = arith.mulf %17, %18 : vector<1x4x256xf32>
    %c0_9 = arith.constant 0 : index
    %c0_10 = arith.constant 0 : index
    %c0_11 = arith.constant 0 : index
    %20 = vector.load %arg2[%c0_9, %c0_10, %c0_11] : memref<1x4x256xf32, #tpu.memory_space<vmem>>, vector<1x4x256xf32>
    tpu.vector_store %arg2[%c0_9, %c0_10, %c0_11], %19 {strides = array<i32>} : memref<1x4x256xf32, #tpu.memory_space<vmem>>, vector<1x4x256xf32>,
    %c0_12 = arith.constant 0 : index
    %c0_13 = arith.constant 0 : index
    %c0_14 = arith.constant 0 : index
    %21 = vector.load %arg3[%c0_12, %c0_13, %c0_14] : memref<1x1x256xf32, #tpu.memory_space<vmem>>, vector<1x1x256xf32>
    tpu.vector_store %arg3[%c0_12, %c0_13, %c0_14], %4 {strides = array<i32>} : memref<1x1x256xf32, #tpu.memory_space<vmem>>, vector<1x1x256xf32>,
    %22 = math.sqrt %13 : vector<1x1x256xf32>
    %c0_15 = arith.constant 0 : index
    %c0_16 = arith.constant 0 : index
    %c0_17 = arith.constant 0 : index
    %23 = vector.load %arg4[%c0_15, %c0_16, %c0_17] : memref<1x1x256xf32, #tpu.memory_space<vmem>>, vector<1x1x256xf32>
    tpu.vector_store %arg4[%c0_15, %c0_16, %c0_17], %22 {strides = array<i32>} : memref<1x1x256xf32, #tpu.memory_space<vmem>>, vector<1x1x256xf32>,
    return
  }
  func.func @transform_0(%arg0: i32) -> (i32, i32, i32) {
    %c0_i32 = arith.constant 0 : i32
    %c0_i32_0 = arith.constant 0 : i32
    %c0_i32_1 = arith.constant 0 : i32
    return %arg0, %c0_i32, %c0_i32_0 : i32, i32, i32
  }
  func.func @transform_1(%arg0: i32) -> (i32, i32, i32) {
    %c0_i32 = arith.constant 0 : i32
    %c0_i32_0 = arith.constant 0 : i32
    %c0_i32_1 = arith.constant 0 : i32
    return %arg0, %c0_i32, %c0_i32_0 : i32, i32, i32
  }
  func.func @transform_2(%arg0: i32) -> (i32, i32, i32) {
    %c0_i32 = arith.constant 0 : i32
    %c0_i32_0 = arith.constant 0 : i32
    %c0_i32_1 = arith.constant 0 : i32
    return %arg0, %c0_i32, %c0_i32_0 : i32, i32, i32
  }
  func.func @transform_3(%arg0: i32) -> (i32, i32, i32) {
    %c0_i32 = arith.constant 0 : i32
    %c0_i32_0 = arith.constant 0 : i32
    %c0_i32_1 = arith.constant 0 : i32
    return %arg0, %c0_i32, %c0_i32_0 : i32, i32, i32
  }
}

</mosaic_0001>

<llo_original>
// kernel: tpu_custom_call.1
$region0: #{tpu_custom_call.1}
  #allocation0 [shape = 'u32[]', space=smem, size = 0x4, offset = 0x4, fixed_abs, tag = 'smem constant byte address 0x4 - core index']
  #allocation1 [shape = 'u32[144,128]{1,0:T(1,128)}', space=vmem, size = 0x12000, scoped, tag = 'internal scratch']
  %s0 = inlined_call_operand.hbm [shape: f32[2,4,256], index: 0, kind: input, shape index: {}]
  %s1 = inlined_call_operand.hbm [shape: f32[2,4,256], index: 1, kind: output, shape index: {0}]
  %s2 = inlined_call_operand.hbm [shape: f32[2,1,256], index: 2, kind: output, shape index: {1}]
  %s3 = inlined_call_operand.hbm [shape: f32[2,1,256], index: 3, kind: output, shape index: {2}]
  %4 = xla_tuple %s1, %s2, %s3
  %s5 = sld [smem:[#allocation0]]
  $region57: #{tpu_custom_call.1} parent=0
    _
  %s7 = ssub.s32 1, %s5
  %s8 = scalar_select 0, %s7, %s5
  $region1: #{tpu_custom_call.1} parent=0
    #allocation2 [shape = 'u8[8192]{0}', space=vmem, size = 0x2000, scoped, tag = 'input window, operand 0']
    #allocation3 [shape = 's32[2]{0}', space=sflag, size = 0x8, scoped, tag = 'scoped memory for tpu_custom_call.1']
    #allocation4 [shape = 's32[2]{0}', space=sflag, size = 0x8, scoped, tag = 'scoped memory for tpu_custom_call.1']
    #allocation5 [shape = 'u8[8192]{0}', space=vmem, size = 0x2000, scoped, tag = 'output window, operand 0']
    #allocation6 [shape = 'u8[2048]{0}', space=vmem, size = 0x800, scoped, tag = 'output window, operand 1']
    #allocation7 [shape = 's32[2]{0}', space=sflag, size = 0x8, scoped, tag = 'scoped memory for tpu_custom_call.1']
    #allocation8 [shape = 'u8[2048]{0}', space=vmem, size = 0x800, scoped, tag = 'output window, operand 2']
    %9 = vsyncpa [#allocation3], 0
    %s10 = scalar_lea.sflag [#allocation3], 1
    %11 = vsyncpa %s10, 0
    %12 = vsyncpa [#allocation4], 0
    %s13 = scalar_lea.sflag [#allocation4], 1
    %14 = vsyncpa %s13, 0
    %15 = vsyncpa [#allocation7], 0
    %s16 = scalar_lea.sflag [#allocation7], 1
    %17 = vsyncpa %s16, 0
    loop: start=0, step=1, limit=4
    $region2: #{tpu_custom_call.1} parent=1 // loop_pre_header
      _
    $region3: #{tpu_custom_call.1} parent=1 // loop_header
      %s19 = sphi 0, %s23
      %p20 = scmp.ge.s32.totalorder %s19, 4
      %s29 = sphi 0, %s31
      %s32 = sphi 0, %s29
      %s33 = sphi 0, %s32
      %s49 = sphi 0, %s33
      %s55 = sphi 0, %s57
      %s58 = sphi 0, %s55
      %s59 = sphi 0, %s58
      %s75 = sphi 0, %s59
      %s81 = sphi 0, %s83
      %s84 = sphi 0, %s81
      %s85 = sphi 0, %s84
      %s101 = sphi 0, %s85
      %s107 = sphi 0, %s109
      %s110 = sphi 0, %s107
      %s111 = sphi 0, %s110
      %s127 = sphi 0, %s111
    $region4: #{tpu_custom_call.1} parent=1 // loop_header_branch
      %22 = sbr.rel (%p20) target = $region8
    $region5: #{tpu_custom_call.1} parent=1 // loop_body
      %s24 = ssub.s32 %s19, 1
      %s25 = ssub.s32 %s19, 2
      %s26 = sadd.s32 %s19, 1
      %s27 = ssub.s32 %s19, %s26
      %p28 = scmp.eq.s32.totalorder %s27, 0
      %s30 = sadd.s32 %s29, 1
      %s31 = scalar_select %p28, %s29, %s30
      %p34 = pneg %p28
      %p35 = scmp.eq.s32.totalorder %s19, 1
      %p36 = por %p34, %p35
      %p37 = scmp.ne.s32.totalorder %s29, %s32
      %p38 = scmp.eq.s32.totalorder %s19, 0
      %p39 = por %p37, %p38
      %p40 = scmp.ne.s32.totalorder %s29, %s32
      %p41 = scmp.eq.s32.totalorder %s24, 1
      %p42 = por %p40, %p41
      %p43 = scmp.ne.s32.totalorder %s32, %s33
      %p44 = scmp.eq.s32.totalorder %s24, 0
      %p45 = por %p43, %p44
      %p46 = scmp.ne.s32.totalorder %s32, %s33
      %p47 = scmp.eq.s32.totalorder %s25, 1
      %p48 = por %p46, %p47
      %p50 = scmp.ne.s32.totalorder %s33, %s49
      %p51 = scmp.eq.s32.totalorder %s25, 0
      %p52 = por %p50, %p51
      %s53 = ssub.s32 %s19, %s26
      %p54 = scmp.eq.s32.totalorder %s53, 0
      %s56 = sadd.s32 %s55, 1
      %s57 = scalar_select %p54, %s55, %s56
      %p60 = pneg %p54
      %p61 = scmp.eq.s32.totalorder %s19, 1
      %p62 = por %p60, %p61
      %p63 = scmp.ne.s32.totalorder %s55, %s58
      %p64 = scmp.eq.s32.totalorder %s19, 0
      %p65 = por %p63, %p64
      %p66 = scmp.ne.s32.totalorder %s55, %s58
      %p67 = scmp.eq.s32.totalorder %s24, 1
      %p68 = por %p66, %p67
      %p69 = scmp.ne.s32.totalorder %s58, %s59
      %p70 = scmp.eq.s32.totalorder %s24, 0
      %p71 = por %p69, %p70
      %p72 = scmp.ne.s32.totalorder %s58, %s59
      %p73 = scmp.eq.s32.totalorder %s25, 1
      %p74 = por %p72, %p73
      %p76 = scmp.ne.s32.totalorder %s59, %s75
      %p77 = scmp.eq.s32.totalorder %s25, 0
      %p78 = por %p76, %p77
      %s79 = ssub.s32 %s19, %s26
      %p80 = scmp.eq.s32.totalorder %s79, 0
      %s82 = sadd.s32 %s81, 1
      %s83 = scalar_select %p80, %s81, %s82
      %p86 = pneg %p80
      %p87 = scmp.eq.s32.totalorder %s19, 1
      %p88 = por %p86, %p87
      %p89 = scmp.ne.s32.totalorder %s81, %s84
      %p90 = scmp.eq.s32.totalorder %s19, 0
      %p91 = por %p89, %p90
      %p92 = scmp.ne.s32.totalorder %s81, %s84
      %p93 = scmp.eq.s32.totalorder %s24, 1
      %p94 = por %p92, %p93
      %p95 = scmp.ne.s32.totalorder %s84, %s85
      %p96 = scmp.eq.s32.totalorder %s24, 0
      %p97 = por %p95, %p96
      %p98 = scmp.ne.s32.totalorder %s84, %s85
      %p99 = scmp.eq.s32.totalorder %s25, 1
      %p100 = por %p98, %p99
      %p102 = scmp.ne.s32.totalorder %s85, %s101
      %p103 = scmp.eq.s32.totalorder %s25, 0
      %p104 = por %p102, %p103
      %s105 = ssub.s32 %s19, %s26
      %p106 = scmp.eq.s32.totalorder %s105, 0
      %s108 = sadd.s32 %s107, 1
      %s109 = scalar_select %p106, %s107, %s108
      %p112 = pneg %p106
      %p113 = scmp.eq.s32.totalorder %s19, 1
      %p114 = por %p112, %p113
      %p115 = scmp.ne.s32.totalorder %s107, %s110
      %p116 = scmp.eq.s32.totalorder %s19, 0
      %p117 = por %p115, %p116
      %p118 = scmp.ne.s32.totalorder %s107, %s110
      %p119 = scmp.eq.s32.totalorder %s24, 1
      %p120 = por %p118, %p119
      %p121 = scmp.ne.s32.totalorder %s110, %s111
      %p122 = scmp.eq.s32.totalorder %s24, 0
      %p123 = por %p121, %p122
      %p124 = scmp.ne.s32.totalorder %s110, %s111
      %p125 = scmp.eq.s32.totalorder %s25, 1
      %p126 = por %p124, %p125
      %p128 = scmp.ne.s32.totalorder %s111, %s127
      %p129 = scmp.eq.s32.totalorder %s25, 0
      %p130 = por %p128, %p129
      %p131 = scmp.le.s32.totalorder 1, %s19
      %p132 = scmp.lt.s32.totalorder %s19, 3
      %p133 = pnand %p131, %p132
      %p134 = pneg %p133
      // Predicated region
      $region9: #{tpu_custom_call.1} parent=5 // pred_check
        _
      $region10: #{tpu_custom_call.1} parent=5 // pred_check_branch
        %136 = sbr.rel (%p133) target = $region12
      $region11: #{tpu_custom_call.1} parent=5 // pred_region
        %s137 = ssub.s32 %s19, 1
      $region12: #{tpu_custom_call.1} parent=5 // pred_fallthru
        _
      %p138 = scmp.lt.s32.totalorder %s19, 2
      // Predicated region
      $region13: #{tpu_custom_call.1} parent=5 // pred_check
        %p139 = pneg %p138
      $region14: #{tpu_custom_call.1} parent=5 // pred_check_branch
        %141 = sbr.rel (%p139) target = $region16
      $region15: #{tpu_custom_call.1} parent=5 // pred_region
        // Predicated region
        $region17: #{tpu_custom_call.1} parent=15 // pred_check
          %p142 = pneg %p39
        $region18: #{tpu_custom_call.1} parent=15 // pred_check_branch
          %144 = sbr.rel (%p142) target = $region20
        $region19: #{tpu_custom_call.1} parent=15 // pred_region
          %s145 = sand.u32 %s29, 1
          %s146 = scalar_lea.sflag [#allocation3], %s145
          %s147 = sand.u32 %s29, 1
          %s148 = smul.addr %s147, 8
          %s149 = scalar_lea.vmem [#allocation2], %s148
          %s151 = ssub.s32 128, 128
          %152 = vsyncadd %s146, %s151
          %s153 = smul.addr %s19, 2
          %s154 = smul.addr %s153, 64
          %s155 = scalar_lea.hbm %s0, %s154
          %s157 = sshll.u32 %s149, 4
          %s158 = int_to_ptr.vmem [resolvable:$true] %s157
          %160 = dma.hbm_to_vmem [thread:$0]  %s155, 128, %s158, %s146
        $region20: #{tpu_custom_call.1} parent=15 // pred_fallthru
          _
      $region16: #{tpu_custom_call.1} parent=5 // pred_fallthru
        _
      %p161 = scmp.le.s32.totalorder 1, %s19
      %p162 = scmp.lt.s32.totalorder %s19, 3
      %p163 = pnand %p161, %p162
      %p164 = pneg %p163
      // Predicated region
      $region21: #{tpu_custom_call.1} parent=5 // pred_check
        _
      $region22: #{tpu_custom_call.1} parent=5 // pred_check_branch
        %166 = sbr.rel (%p163) target = $region24
      $region23: #{tpu_custom_call.1} parent=5 // pred_region
        %s167 = ssub.s32 %s19, 1
        %s168 = sand.u32 %s32, 1
        %s169 = scalar_lea.sflag [#allocation3], %s168
        %s170 = sand.u32 %s32, 1
        %s171 = smul.addr %s170, 8
        %s172 = scalar_lea.vmem [#allocation2], %s171
        // Predicated region
        $region25: #{tpu_custom_call.1} parent=23 // pred_check
          %p173 = pneg %p45
        $region26: #{tpu_custom_call.1} parent=23 // pred_check_branch
          %175 = sbr.rel (%p173) target = $region28
        $region27: #{tpu_custom_call.1} parent=23 // pred_region
          %176 = dma.done %s169, 128
        $region28: #{tpu_custom_call.1} parent=23 // pred_fallthru
          _
        %s177 = sand.u32 %s32, 1
        %s178 = scalar_lea.sflag [#allocation3], %s177
        %s179 = sand.u32 %s32, 1
        %s180 = smul.addr %s179, 8
        %s181 = scalar_lea.vmem [#allocation2], %s180
        %p182 = pneg %p45
        %p183 = pneg %p42
        %p184 = pneg %p71
        %p185 = pneg %p68
        %s186 = sand.u32 %s58, 1
        %s187 = scalar_lea.sflag [#allocation4], %s186
        %s188 = sand.u32 %s58, 1
        %s189 = smul.addr %s188, 8
        %s190 = scalar_lea.vmem [#allocation5], %s189
        %p191 = pneg %p97
        %p192 = pneg %p94
        %s193 = sand.u32 %s24, 1
        %s194 = scalar_lea.sflag [#allocation7], %s193
        %s195 = sand.u32 %s84, 1
        %s196 = smul.addr %s195, 2
        %s197 = scalar_lea.vmem [#allocation6], %s196
        %p198 = pneg %p123
        %p199 = pneg %p120
        %s200 = sand.u32 %s24, 1
        %s201 = scalar_lea.sflag [#allocation7], %s200
        %s202 = sand.u32 %s110, 1
        %s203 = smul.addr %s202, 2
        %s204 = scalar_lea.vmem [#allocation8], %s203
        %v205 = vld [vmem:[%s172] sm:$0xff]
        %v207 = vcombine.high %v205, %v205
        %vm209 = vcmask 1043456
        %v210 = vsel %vm209, %v205, 0.0
        %v211 = vrot.slane %v210, 4
        %v212 = vadd.f32 %v210, %v211
        %v213 = vrot.slane %v212, 2
        %v214 = vadd.f32 %v212, %v213
        %v215 = vrot.slane %v214, 1
        %v216 = vadd.f32 %v214, %v215
        %v217 = vsel %vm209, %v207, 0.0
        %v218 = vrot.slane %v217, 4
        %v219 = vadd.f32 %v217, %v218
        %v220 = vrot.slane %v219, 2
        %v221 = vadd.f32 %v219, %v220
        %v222 = vrot.slane %v221, 1
        %v223 = vadd.f32 %v221, %v222
        %v224 = vrcp.pop 4.0
        %v225 = vmul.f32 %v216, %v224
        %v226 = vmul.f32 %v223, %v224
        %v229 = vcombine.low %v225, %v226
        %v231 = vsub.f32 %v205, %v229
        %v232 = vmul.f32 %v231, %v231
        %v234 = vcombine.high %v232, %v232
        %v236 = vsel %vm209, %v232, 0.0
        %v237 = vrot.slane %v236, 4
        %v238 = vadd.f32 %v236, %v237
        %v239 = vrot.slane %v238, 2
        %v240 = vadd.f32 %v238, %v239
        %v241 = vrot.slane %v240, 1
        %v242 = vadd.f32 %v240, %v241
        %v243 = vsel %vm209, %v234, 0.0
        %v244 = vrot.slane %v243, 4
        %v245 = vadd.f32 %v243, %v244
        %v246 = vrot.slane %v245, 2
        %v247 = vadd.f32 %v245, %v246
        %v248 = vrot.slane %v247, 1
        %v249 = vadd.f32 %v247, %v248
        %v250 = vmul.f32 %v242, 0.33333334
        %v251 = vmul.f32 %v249, 0.33333334
        %v252 = vadd.f32 %v250, 1e-05
        %v253 = vadd.f32 %v251, 1e-05
        %v254 = vrsqrt.pop %v252
        %v255 = vrsqrt.pop %v253
        %v258 = vcombine.low %v254, %v255
        %v260 = vmul.f32 %v231, %v258
        %261 = vst [vmem:[%s190] sm:$0xff] %v260
        %v263 = vunpack.c.l.s4 1966171168
        %v264 = vunpack.c.0.s8 %v263
        %v265 = vlaneseq
        %v266 = vshrl.u32 %v265, 7
        %v267 = vsub.s32 %v264, %v266
        %v268 = vrot.slane %v229, %v267
        %v270 = vunpack.c.l.s4 1966171168
        %v271 = vunpack.c.0.s8 %v270
        %v272 = vlaneseq
        %v273 = vshrl.u32 %v272, 7
        %v274 = vsub.s32 %v271, %v273
        %v275 = vrot.slane %v268, %v274
        %v277 = vlaneseq
        %vm278 = vcmp.ge.s32.totalorder %v277, 0
        %vm279 = vcmp.lt.s32.totalorder %v277, 256
        %vm280 = vmand %vm278, %vm279
        %281 = vst.msk [vmem:[%s197] sm:$0x3] %vm280, %v275
        %v282 = vrsqrt.pop %v252
        %v283 = vmul.f32 %v252, %v282
        %vm284 = vcmp.eq.f32.partialorder %v252, inf
        %v285 = vsel %vm284, %v252, %v283
        %vm286 = vcmp.eq.f32.partialorder %v252, 0.0
        %v287 = vand.u32 %v252, 2147483648
        %v288 = vsel %vm286, %v287, %v285
        %v289 = vrsqrt.pop %v253
        %v290 = vmul.f32 %v253, %v289
        %vm291 = vcmp.eq.f32.partialorder %v253, inf
        %v292 = vsel %vm291, %v253, %v290
        %vm293 = vcmp.eq.f32.partialorder %v253, 0.0
        %v294 = vand.u32 %v253, 2147483648
        %v295 = vsel %vm293, %v294, %v292
        %v298 = vcombine.low %v288, %v295
        %v300 = vunpack.c.l.s4 1966171168
        %v301 = vunpack.c.0.s8 %v300
        %v302 = vlaneseq
        %v303 = vshrl.u32 %v302, 7
        %v304 = vsub.s32 %v301, %v303
        %v305 = vrot.slane %v298, %v304
        %v307 = vunpack.c.l.s4 1966171168
        %v308 = vunpack.c.0.s8 %v307
        %v309 = vlaneseq
        %v310 = vshrl.u32 %v309, 7
        %v311 = vsub.s32 %v308, %v310
        %v312 = vrot.slane %v305, %v311
        %314 = vst.msk [vmem:[%s204] sm:$0x3] %vm280, %v312
        %s315 = sand.u32 %s58, 1
        %s316 = scalar_lea.sflag [#allocation4], %s315
        %s317 = sand.u32 %s58, 1
        %s318 = smul.addr %s317, 8
        %s319 = scalar_lea.vmem [#allocation5], %s318
        %s320 = sand.u32 %s24, 1
        %s321 = scalar_lea.sflag [#allocation7], %s320
        %s322 = sand.u32 %s84, 1
        %s323 = smul.addr %s322, 2
        %s324 = scalar_lea.vmem [#allocation6], %s323
        %s325 = sand.u32 %s24, 1
        %s326 = scalar_lea.sflag [#allocation7], %s325
        %s327 = sand.u32 %s110, 1
        %s328 = smul.addr %s327, 2
        %s329 = scalar_lea.vmem [#allocation8], %s328
        // Predicated region
        $region29: #{tpu_custom_call.1} parent=23 // pred_check
          %p330 = pneg %p68
        $region30: #{tpu_custom_call.1} parent=23 // pred_check_branch
          %332 = sbr.rel (%p330) target = $region32
        $region31: #{tpu_custom_call.1} parent=23 // pred_region
          %s334 = ssub.s32 128, 128
          %335 = vsyncadd %s316, %s334
          %s336 = smul.addr %s24, 2
          %s337 = smul.addr %s336, 64
          %s338 = scalar_lea.hbm %s1, %s337
          %s340 = sshll.u32 %s319, 4
          %s341 = int_to_ptr.vmem [resolvable:$true] %s340
          %343 = dma.vmem_to_hbm [thread:$0]  %s341, 128, %s338, %s316
        $region32: #{tpu_custom_call.1} parent=23 // pred_fallthru
          _
        // Predicated region
        $region33: #{tpu_custom_call.1} parent=23 // pred_check
          %p344 = pneg %p94
        $region34: #{tpu_custom_call.1} parent=23 // pred_check_branch
          %346 = sbr.rel (%p344) target = $region36
        $region35: #{tpu_custom_call.1} parent=23 // pred_region
          %s348 = ssub.s32 32, 32
          %349 = vsyncadd %s321, %s348
          %s350 = smul.addr %s24, 2
          %s351 = smul.addr %s350, 16
          %s352 = scalar_lea.hbm %s2, %s351
          %s354 = sshll.u32 %s324, 4
          %s355 = int_to_ptr.vmem [resolvable:$true] %s354
          %357 = dma.vmem_to_hbm [thread:$0]  %s355, 32, %s352, %s321
        $region36: #{tpu_custom_call.1} parent=23 // pred_fallthru
          _
        // Predicated region
        $region37: #{tpu_custom_call.1} parent=23 // pred_check
          %p358 = pneg %p120
        $region38: #{tpu_custom_call.1} parent=23 // pred_check_branch
          %360 = sbr.rel (%p358) target = $region40
        $region39: #{tpu_custom_call.1} parent=23 // pred_region
          %s362 = ssub.s32 32, 32
          %363 = vsyncadd %s326, %s362
          %s364 = smul.addr %s24, 2
          %s365 = smul.addr %s364, 16
          %s366 = scalar_lea.hbm %s3, %s365
          %s368 = sshll.u32 %s329, 4
          %s369 = int_to_ptr.vmem [resolvable:$true] %s368
          %371 = dma.vmem_to_hbm [thread:$0]  %s369, 32, %s366, %s326
        $region40: #{tpu_custom_call.1} parent=23 // pred_fallthru
          _
      $region24: #{tpu_custom_call.1} parent=5 // pred_fallthru
        _
      %p372 = scmp.le.s32.totalorder 2, %s19
      // Predicated region
      $region41: #{tpu_custom_call.1} parent=5 // pred_check
        %p373 = pneg %p372
      $region42: #{tpu_custom_call.1} parent=5 // pred_check_branch
        %375 = sbr.rel (%p373) target = $region44
      $region43: #{tpu_custom_call.1} parent=5 // pred_region
        %s376 = ssub.s32 %s19, 2
        // Predicated region
        $region45: #{tpu_custom_call.1} parent=43 // pred_check
          %p377 = pneg %p74
        $region46: #{tpu_custom_call.1} parent=43 // pred_check_branch
          %379 = sbr.rel (%p377) target = $region48
        $region47: #{tpu_custom_call.1} parent=43 // pred_region
          %s380 = sand.u32 %s59, 1
          %s381 = scalar_lea.sflag [#allocation4], %s380
          %s382 = sand.u32 %s59, 1
          %s383 = smul.addr %s382, 8
          %s384 = scalar_lea.vmem [#allocation5], %s383
          %385 = dma.done %s381, 128
        $region48: #{tpu_custom_call.1} parent=43 // pred_fallthru
          _
        // Predicated region
        $region49: #{tpu_custom_call.1} parent=43 // pred_check
          %p386 = pneg %p100
        $region50: #{tpu_custom_call.1} parent=43 // pred_check_branch
          %388 = sbr.rel (%p386) target = $region52
        $region51: #{tpu_custom_call.1} parent=43 // pred_region
          %s389 = sand.u32 %s25, 1
          %s390 = scalar_lea.sflag [#allocation7], %s389
          %s391 = sand.u32 %s85, 1
          %s392 = smul.addr %s391, 2
          %s393 = scalar_lea.vmem [#allocation6], %s392
          %394 = dma.done %s390, 32
        $region52: #{tpu_custom_call.1} parent=43 // pred_fallthru
          _
        // Predicated region
        $region53: #{tpu_custom_call.1} parent=43 // pred_check
          %p395 = pneg %p126
        $region54: #{tpu_custom_call.1} parent=43 // pred_check_branch
          %397 = sbr.rel (%p395) target = $region56
        $region55: #{tpu_custom_call.1} parent=43 // pred_region
          %s398 = sand.u32 %s25, 1
          %s399 = scalar_lea.sflag [#allocation7], %s398
          %s400 = sand.u32 %s111, 1
          %s401 = smul.addr %s400, 2
          %s402 = scalar_lea.vmem [#allocation8], %s401
          %403 = dma.done %s399, 32
        $region56: #{tpu_custom_call.1} parent=43 // pred_fallthru
          _
      $region44: #{tpu_custom_call.1} parent=5 // pred_fallthru
        _
    $region6: #{tpu_custom_call.1} parent=1 // loop_footer
      %s23 = sadd.s32 1, %s19
    $region7: #{tpu_custom_call.1} parent=1 // loop_footer_branch
      %18 = sbr.rel target = $region3
    $region8: #{tpu_custom_call.1} parent=1 // loop_exit
      _
    %404 = vsyncpa [#allocation3], 1
    %s405 = scalar_lea.sflag [#allocation3], 1
    %406 = vsyncpa %s405, 1
    %407 = vsyncpa [#allocation4], 1
    %s408 = scalar_lea.sflag [#allocation4], 1
    %409 = vsyncpa %s408, 1
    %410 = vsyncpa [#allocation7], 1
    %s411 = scalar_lea.sflag [#allocation7], 1
    %412 = vsyncpa %s411, 1

</llo_original>
